<compile_context>
chip_gen: v6e
topology: v6e:2x2x1
jax: 0.10.0
libtpu: 0.0.40
codegen_flags: <defaults>
</compile_context>

<pallas_src>
import functools
import math

import jax
import jax.numpy as jnp
from jax import lax
from jax.experimental import pallas as pl
from jax.experimental.pallas import tpu as pltpu

_LANES = 128
_SUBLANES = 8
_NUM_CORES = 2            # v7x has 2 TensorCores; a size-2 "parallel" axis is free on 1-TC chips
_TILE_BYTES = 1 << 20     # target ~1 MiB per input per pipeline buffer


def _cdiv(a, b):
    return -(-a // b)


def _round_up(x, m):
    return ((x + m - 1) // m) * m


def _wing_kernel(pred_ref, tgt_ref, out_ref, acc_ref, *,
                 omega, inv_epsilon, c_const,
                 total_rows, tile_rows, steps_per_core, ragged):
    c = pl.program_id(0)
    i = pl.program_id(1)

    @pl.when(i == 0)
    def _init():
        acc_ref[...] = jnp.zeros_like(acc_ref)

    y = tgt_ref[...].astype(jnp.float32)
    y_hat = jax.nn.sigmoid(pred_ref[...].astype(jnp.float32))
    delta = jnp.abs(y - y_hat)
    loss = jnp.where(delta < omega,
                     omega * jnp.log(1.0 + delta * inv_epsilon),   # d <  omega branch
                     delta - c_const)                              # d >= omega branch

    if ragged:
        # Rows at/after `total_rows` belong to a partially out-of-bounds (or clamped)
        # block; their VMEM contents are garbage, so zero their contribution.
        start = (c * steps_per_core + i) * tile_rows
        row_ids = lax.broadcasted_iota(jnp.int32, loss.shape, 0)
        loss = jnp.where(row_ids < (total_rows - start), loss, 0.0)

    # Sublane-group reduction: element-wise vreg adds into the (8,128) accumulator.
    acc_ref[...] += jnp.sum(
        loss.reshape(tile_rows // _SUBLANES, _SUBLANES, _LANES), axis=0)

    @pl.when(i == pl.num_programs(1) - 1)
    def _finalize():
        out_ref[...] = acc_ref[...]   # lane-dense (8,128) per-core partial-sum block


def wing_loss(pred, target, omega=10.0, epsilon=2.0):
    """Wing loss averaged over all elements. pred: raw logits, target: values in [0,1]."""
    assert pred.shape == target.shape
    n = pred.size
    omega = float(omega)
    epsilon = float(epsilon)
    c_const = omega - omega * math.log(1.0 + omega / epsilon)

    pred_flat = pred.reshape(-1)
    tgt_flat = target.reshape(-1)

    # Pad flat length to a whole number of (8,128) vregs (<= 1023 neutral elements).
    # sigmoid(0) == 0.5 and |0.5 - 0.5| == 0  =>  wing == 0: exact zero contribution.
    padded_n = _round_up(n, _SUBLANES * _LANES)
    if padded_n != n:
        if not jnp.issubdtype(tgt_flat.dtype, jnp.floating):
            tgt_flat = tgt_flat.astype(jnp.float32)
        pad = padded_n - n
        pred_flat = jnp.concatenate([pred_flat, jnp.zeros((pad,), pred_flat.dtype)])
        tgt_flat = jnp.concatenate([tgt_flat, jnp.full((pad,), 0.5, tgt_flat.dtype)])

    rows = padded_n // _LANES
    pred2d = pred_flat.reshape(rows, _LANES)
    tgt2d = tgt_flat.reshape(rows, _LANES)

    # Dtype-aware tile sizing (sublane aligned, never larger than one core's share).
    max_itemsize = max(pred2d.dtype.itemsize, tgt2d.dtype.itemsize)
    max_tile_rows = max(_SUBLANES,
                        (_TILE_BYTES // (_LANES * max_itemsize)) // _SUBLANES * _SUBLANES)
    rows_per_core = _cdiv(rows, _NUM_CORES)
    tile_rows = min(max_tile_rows, _round_up(rows_per_core, _SUBLANES))
    steps_per_core = _cdiv(rows_per_core, tile_rows)
    num_row_blocks = _cdiv(rows, tile_rows)            # row-blocks actually backed by data
    ragged = (_NUM_CORES * steps_per_core * tile_rows != rows)

    def in_index_map(c, i):
        # Clamp so a trailing fully out-of-range step re-reads the last valid block;
        # the in-kernel row mask zeroes its contribution.
        return (jnp.minimum(c * steps_per_core + i, num_row_blocks - 1), 0)

    kernel = functools.partial(
        _wing_kernel, omega=omega, inv_epsilon=1.0 / epsilon, c_const=c_const,
        total_rows=rows, tile_rows=tile_rows, steps_per_core=steps_per_core,
        ragged=ragged)

    out = pl.pallas_call(
        kernel,
        out_shape=jax.ShapeDtypeStruct((_NUM_CORES * _SUBLANES, _LANES), jnp.float32),
        grid_spec=pltpu.PrefetchScalarGridSpec(
            num_scalar_prefetch=0,
            grid=(_NUM_CORES, steps_per_core),
            in_specs=[
                pl.BlockSpec((tile_rows, _LANES), in_index_map),
                pl.BlockSpec((tile_rows, _LANES), in_index_map),
            ],
            out_specs=pl.BlockSpec((_SUBLANES, _LANES), lambda c, i: (c, 0)),
            scratch_shapes=[pltpu.VMEM((_SUBLANES, _LANES), jnp.float32)],
        ),
        compiler_params=pltpu.CompilerParams(
            dimension_semantics=("parallel", "arbitrary"),
            vmem_limit_bytes=32 * 1024 * 1024,
        ),
    )(pred2d, tgt2d)

    # Per-core (8,128) partial sums -> scalar mean (tiny reduction in plain JAX).
    return jnp.sum(out) / jnp.float32(n)


if __name__ == "__main__":
    key = jax.random.PRNGKey(0)
    k1, k2 = jax.random.split(key)

    # Small shapes consistent with typical use: (B, C, H, W)
    B, C, H, W = 2, 4, 16, 16
    predicted = jax.random.normal(k1, (B, C, H, W), dtype=jnp.float32)   # raw logits
    target = jax.random.uniform(k2, (B, C, H, W), dtype=jnp.float32)     # labels in [0, 1]

    loss = wing_loss(predicted, target)
    jax.block_until_ready(loss)

    # Pure-JAX reference of the same semantics.
    omega, epsilon = 10.0, 2.0
    y_hat = jax.nn.sigmoid(predicted)
    delta = jnp.abs(target - y_hat)
    c_const = omega - omega * math.log(1.0 + omega / epsilon)
    elem = jnp.where(delta < omega,
                     omega * jnp.log(1.0 + delta / epsilon),
                     delta - c_const)
    ref = jnp.sum(elem) / predicted.size

    assert jnp.allclose(loss, ref, rtol=1e-5, atol=1e-5), (loss, ref)
    print("KERNEL_OK")
</pallas_src>

<mosaic_0001>
module attributes {stable_mosaic.version = 11 : i64} {
  func.func @_wing_kernel(%arg0: i32, %arg1: i32, %arg2: memref<8x128xf32, #tpu.memory_space<vmem>>, %arg3: memref<8x128xf32, #tpu.memory_space<vmem>>, %arg4: memref<8x128xf32, #tpu.memory_space<vmem>>, %arg5: memref<8x128xf32, #tpu.memory_space<vmem>>) attributes {dimension_semantics = [#tpu.dimension_semantics<parallel>, #tpu.dimension_semantics<arbitrary>], iteration_bounds = array<i64: 2, 1>, scalar_prefetch = 0 : i64, scratch_operands = 1 : i64, tpu.core_type = #tpu.core_type<tc>, window_params = [{transform_indices = @transform_0, window_bounds = array<i64: 8, 128>}, {transform_indices = @transform_1, window_bounds = array<i64: 8, 128>}, {transform_indices = @transform_2, window_bounds = array<i64: 8, 128>}]} {
    %c0_i32 = arith.constant 0 : i32
    %0 = arith.cmpi eq, %arg1, %c0_i32 : i32
    %1 = arith.extui %0 : i1 to i32
    %c0_i32_0 = arith.constant 0 : i32
    %2 = arith.cmpi ne, %1, %c0_i32_0 : i32
    scf.if %2 {
      %cst_16 = arith.constant 0.000000e+00 : f32
      %32 = vector.broadcast %cst_16 : f32 to vector<8x128xf32>
      %c0_17 = arith.constant 0 : index
      %c0_18 = arith.constant 0 : index
      %33 = vector.load %arg5[%c0_17, %c0_18] : memref<8x128xf32, #tpu.memory_space<vmem>>, vector<8x128xf32>
      tpu.vector_store %arg5[%c0_17, %c0_18], %32 {strides = array<i32>} : memref<8x128xf32, #tpu.memory_space<vmem>>, vector<8x128xf32>,
    } else {
    }
    %c0 = arith.constant 0 : index
    %c0_1 = arith.constant 0 : index
    %3 = vector.load %arg3[%c0, %c0_1] : memref<8x128xf32, #tpu.memory_space<vmem>>, vector<8x128xf32>
    %c0_2 = arith.constant 0 : index
    %c0_3 = arith.constant 0 : index
    %4 = vector.load %arg2[%c0_2, %c0_3] : memref<8x128xf32, #tpu.memory_space<vmem>>, vector<8x128xf32>
    %5 = arith.negf %4 : vector<8x128xf32>
    %6 = math.exp %5 : vector<8x128xf32>
    %cst = arith.constant 1.000000e+00 : f32
    %7 = vector.broadcast %cst : f32 to vector<8x128xf32>
    %8 = arith.addf %7, %6 : vector<8x128xf32>
    %9 = arith.divf %7, %8 : vector<8x128xf32>
    %10 = arith.subf %3, %9 : vector<8x128xf32>
    %11 = math.absf %10 : vector<8x128xf32>
    %cst_4 = arith.constant 1.000000e+01 : f32
    %12 = vector.broadcast %cst_4 : f32 to vector<8x128xf32>
    %13 = arith.cmpf olt, %11, %12 : vector<8x128xf32>
    %cst_5 = arith.constant 5.000000e-01 : f32
    %14 = vector.broadcast %cst_5 : f32 to vector<8x128xf32>
    %15 = arith.mulf %11, %14 : vector<8x128xf32>
    %cst_6 = arith.constant 1.000000e+00 : f32
    %16 = vector.broadcast %cst_6 : f32 to vector<8x128xf32>
    %17 = arith.addf %16, %15 : vector<8x128xf32>
    %18 = math.log %17 : vector<8x128xf32>
    %cst_7 = arith.constant 1.000000e+01 : f32
    %19 = vector.broadcast %cst_7 : f32 to vector<8x128xf32>
    %20 = arith.mulf %19, %18 : vector<8x128xf32>
    %cst_8 = arith.constant -7.9175949 : f32
    %21 = vector.broadcast %cst_8 : f32 to vector<8x128xf32>
    %22 = arith.subf %11, %21 : vector<8x128xf32>
    %23 = arith.select %13, %20, %22 : vector<8x128xi1>, vector<8x128xf32>
    %c0_9 = arith.constant 0 : index
    %c0_10 = arith.constant 0 : index
    %24 = vector.load %arg5[%c0_9, %c0_10] : memref<8x128xf32, #tpu.memory_space<vmem>>, vector<8x128xf32>
    %25 = vector.shape_cast %23 : vector<8x128xf32> to vector<1x8x128xf32>
    %cst_11 = arith.constant dense<0.000000e+00> : vector<8x128xf32>
    %26 = vector.multi_reduction <add>, %25, %cst_11 [0] : vector<1x8x128xf32> to vector<8x128xf32>
    %27 = arith.addf %24, %26 : vector<8x128xf32>
    %c0_12 = arith.constant 0 : index
    %c0_13 = arith.constant 0 : index
    %28 = vector.load %arg5[%c0_12, %c0_13] : memref<8x128xf32, #tpu.memory_space<vmem>>, vector<8x128xf32>
    tpu.vector_store %arg5[%c0_12, %c0_13], %27 {strides = array<i32>} : memref<8x128xf32, #tpu.memory_space<vmem>>, vector<8x128xf32>,
    %c0_i32_14 = arith.constant 0 : i32
    %29 = arith.cmpi eq, %arg1, %c0_i32_14 : i32
    %30 = arith.extui %29 : i1 to i32
    %c0_i32_15 = arith.constant 0 : i32
    %31 = arith.cmpi ne, %30, %c0_i32_15 : i32
    scf.if %31 {
      %c0_16 = arith.constant 0 : index
      %c0_17 = arith.constant 0 : index
      %32 = vector.load %arg5[%c0_16, %c0_17] : memref<8x128xf32, #tpu.memory_space<vmem>>, vector<8x128xf32>
      %c0_18 = arith.constant 0 : index
      %c0_19 = arith.constant 0 : index
      %33 = vector.load %arg4[%c0_18, %c0_19] : memref<8x128xf32, #tpu.memory_space<vmem>>, vector<8x128xf32>
      tpu.vector_store %arg4[%c0_18, %c0_19], %32 {strides = array<i32>} : memref<8x128xf32, #tpu.memory_space<vmem>>, vector<8x128xf32>,
    } else {
    }
    return
  }
  func.func @transform_0(%arg0: i32, %arg1: i32) -> (i32, i32) {
    %c1_i32 = arith.constant 1 : i32
    %0 = arith.muli %arg0, %c1_i32 : i32
    %1 = arith.addi %0, %arg1 : i32
    %c1_i32_0 = arith.constant 1 : i32
    %2 = arith.minsi %1, %c1_i32_0 : i32
    %c0_i32 = arith.constant 0 : i32
    %c0_i32_1 = arith.constant 0 : i32
    return %2, %c0_i32 : i32, i32
  }
  func.func @transform_1(%arg0: i32, %arg1: i32) -> (i32, i32) {
    %c1_i32 = arith.constant 1 : i32
    %0 = arith.muli %arg0, %c1_i32 : i32
    %1 = arith.addi %0, %arg1 : i32
    %c1_i32_0 = arith.constant 1 : i32
    %2 = arith.minsi %1, %c1_i32_0 : i32
    %c0_i32 = arith.constant 0 : i32
    %c0_i32_1 = arith.constant 0 : i32
    return %2, %c0_i32 : i32, i32
  }
  func.func @transform_2(%arg0: i32, %arg1: i32) -> (i32, i32) {
    %c0_i32 = arith.constant 0 : i32
    %c0_i32_0 = arith.constant 0 : i32
    return %arg0, %c0_i32 : i32, i32
  }
}

</mosaic_0001>

<llo_original>
// kernel: tpu_custom_call.1
$region0: #{tpu_custom_call.1}
  #allocation0 [shape = 'u32[]', space=smem, size = 0x4, offset = 0x4, fixed_abs, tag = 'smem constant byte address 0x4 - core index']
  #allocation1 [shape = 'u32[144,128]{1,0:T(1,128)}', space=vmem, size = 0x12000, scoped, tag = 'internal scratch']
  #allocation2 [shape = 'f32[8,128]{1,0:T(8,128)}', space=vmem, size = 0x1000, scoped, tag = 'scratch operand']
  %s0 = inlined_call_operand.hbm [shape: f32[16,128], index: 0, kind: input, shape index: {}]
  %s1 = inlined_call_operand.hbm [shape: f32[16,128], index: 1, kind: input, shape index: {}]
  %s2 = inlined_call_operand.hbm [shape: f32[16,128], index: 2, kind: output, shape index: {}]
  %s3 = sld [smem:[#allocation0]]
  $region57: #{tpu_custom_call.1} parent=0
    _
  %s5 = ssub.s32 1, %s3
  %s6 = scalar_select 0, %s5, %s3
  $region1: #{tpu_custom_call.1} parent=0
    #allocation3 [shape = 'u8[8192]{0}', space=vmem, size = 0x2000, scoped, tag = 'input window, operand 0']
    #allocation4 [shape = 's32[2]{0}', space=sflag, size = 0x8, scoped, tag = 'scoped memory for tpu_custom_call.1']
    #allocation5 [shape = 's32[2]{0}', space=sflag, size = 0x8, scoped, tag = 'scoped memory for tpu_custom_call.1']
    #allocation6 [shape = 'u8[8192]{0}', space=vmem, size = 0x2000, scoped, tag = 'input window, operand 1']
    #allocation7 [shape = 's32[2]{0}', space=sflag, size = 0x8, scoped, tag = 'scoped memory for tpu_custom_call.1']
    #allocation8 [shape = 'u8[8192]{0}', space=vmem, size = 0x2000, scoped, tag = 'output window, operand 0']
    %7 = vsyncpa [#allocation4], 0
    %s8 = scalar_lea.sflag [#allocation4], 1
    %9 = vsyncpa %s8, 0
    %10 = vsyncpa [#allocation7], 0
    %s11 = scalar_lea.sflag [#allocation7], 1
    %12 = vsyncpa %s11, 0
    %13 = vsyncpa [#allocation5], 0
    %s14 = scalar_lea.sflag [#allocation5], 1
    %15 = vsyncpa %s14, 0
    loop: start=0, step=1, limit=4
    $region2: #{tpu_custom_call.1} parent=1 // loop_pre_header
      _
    $region3: #{tpu_custom_call.1} parent=1 // loop_header
      %s17 = sphi 0, %s21
      %p18 = scmp.ge.s32.totalorder %s17, 4
      %s24 = sphi 0, %s36
      %s25 = sphi 0, %s32
      %s26 = sphi 0, %s24
      %s27 = sphi 0, %s25
      %s28 = sphi 0, %s26
      %s29 = sphi 0, %s27
      %s45 = sphi 0, %s47
      %s48 = sphi 0, %s45
      %s49 = sphi 0, %s48
      %s65 = sphi 0, %s49
      %s77 = sphi 0, %s79
      %s80 = sphi 0, %s77
      %s81 = sphi 0, %s80
      %s97 = sphi 0, %s81
      %s103 = sphi 0, %s105
      %s106 = sphi 0, %s103
      %s107 = sphi 0, %s106
      %s123 = sphi 0, %s107
    $region4: #{tpu_custom_call.1} parent=1 // loop_header_branch
      %20 = sbr.rel (%p18) target = $region8
    $region5: #{tpu_custom_call.1} parent=1 // loop_body
      %s22 = ssub.s32 %s17, 1
      %s23 = ssub.s32 %s17, 2
      %s30 = sadd.s32 1, %s25
      %p31 = scmp.ge.s32.totalorder %s30, 1
      %s32 = scalar_select %p31, 0, %s30
      %s33 = sadd.s32 1, %s24
      %s34 = scalar_select %p31, %s33, %s24
      %p35 = scmp.ge.s32.totalorder %s34, 2
      %s36 = scalar_select %p35, 0, %s34
      %s37 = sadd.s32 %s24, %s25
      %p38 = scmp.lt.s32.totalorder %s37, 1
      %s39 = scalar_select %p38, %s37, 1
      %s40 = sadd.s32 %s36, %s32
      %p41 = scmp.lt.s32.totalorder %s40, 1
      %s42 = scalar_select %p41, %s40, 1
      %s43 = ssub.s32 %s39, %s42
      %p44 = scmp.eq.s32.totalorder %s43, 0
      %s46 = sadd.s32 %s45, 1
      %s47 = scalar_select %p44, %s45, %s46
      %p50 = pneg %p44
      %p51 = scmp.eq.s32.totalorder %s17, 1
      %p52 = por %p50, %p51
      %p53 = scmp.ne.s32.totalorder %s45, %s48
      %p54 = scmp.eq.s32.totalorder %s17, 0
      %p55 = por %p53, %p54
      %p56 = scmp.ne.s32.totalorder %s45, %s48
      %p57 = scmp.eq.s32.totalorder %s22, 1
      %p58 = por %p56, %p57
      %p59 = scmp.ne.s32.totalorder %s48, %s49
      %p60 = scmp.eq.s32.totalorder %s22, 0
      %p61 = por %p59, %p60
      %p62 = scmp.ne.s32.totalorder %s48, %s49
      %p63 = scmp.eq.s32.totalorder %s23, 1
      %p64 = por %p62, %p63
      %p66 = scmp.ne.s32.totalorder %s49, %s65
      %p67 = scmp.eq.s32.totalorder %s23, 0
      %p68 = por %p66, %p67
      %s69 = sadd.s32 %s24, %s25
      %p70 = scmp.lt.s32.totalorder %s69, 1
      %s71 = scalar_select %p70, %s69, 1
      %s72 = sadd.s32 %s36, %s32
      %p73 = scmp.lt.s32.totalorder %s72, 1
      %s74 = scalar_select %p73, %s72, 1
      %s75 = ssub.s32 %s71, %s74
      %p76 = scmp.eq.s32.totalorder %s75, 0
      %s78 = sadd.s32 %s77, 1
      %s79 = scalar_select %p76, %s77, %s78
      %p82 = pneg %p76
      %p83 = scmp.eq.s32.totalorder %s17, 1
      %p84 = por %p82, %p83
      %p85 = scmp.ne.s32.totalorder %s77, %s80
      %p86 = scmp.eq.s32.totalorder %s17, 0
      %p87 = por %p85, %p86
      %p88 = scmp.ne.s32.totalorder %s77, %s80
      %p89 = scmp.eq.s32.totalorder %s22, 1
      %p90 = por %p88, %p89
      %p91 = scmp.ne.s32.totalorder %s80, %s81
      %p92 = scmp.eq.s32.totalorder %s22, 0
      %p93 = por %p91, %p92
      %p94 = scmp.ne.s32.totalorder %s80, %s81
      %p95 = scmp.eq.s32.totalorder %s23, 1
      %p96 = por %p94, %p95
      %p98 = scmp.ne.s32.totalorder %s81, %s97
      %p99 = scmp.eq.s32.totalorder %s23, 0
      %p100 = por %p98, %p99
      %s101 = ssub.s32 %s24, %s36
      %p102 = scmp.eq.s32.totalorder %s101, 0
      %s104 = sadd.s32 %s103, 1
      %s105 = scalar_select %p102, %s103, %s104
      %p108 = pneg %p102
      %p109 = scmp.eq.s32.totalorder %s17, 1
      %p110 = por %p108, %p109
      %p111 = scmp.ne.s32.totalorder %s103, %s106
      %p112 = scmp.eq.s32.totalorder %s17, 0
      %p113 = por %p111, %p112
      %p114 = scmp.ne.s32.totalorder %s103, %s106
      %p115 = scmp.eq.s32.totalorder %s22, 1
      %p116 = por %p114, %p115
      %p117 = scmp.ne.s32.totalorder %s106, %s107
      %p118 = scmp.eq.s32.totalorder %s22, 0
      %p119 = por %p117, %p118
      %p120 = scmp.ne.s32.totalorder %s106, %s107
      %p121 = scmp.eq.s32.totalorder %s23, 1
      %p122 = por %p120, %p121
      %p124 = scmp.ne.s32.totalorder %s107, %s123
      %p125 = scmp.eq.s32.totalorder %s23, 0
      %p126 = por %p124, %p125
      %p127 = scmp.le.s32.totalorder 1, %s17
      %p128 = scmp.lt.s32.totalorder %s17, 3
      %p129 = pnand %p127, %p128
      %p130 = pneg %p129
      // Predicated region
      $region9: #{tpu_custom_call.1} parent=5 // pred_check
        _
      $region10: #{tpu_custom_call.1} parent=5 // pred_check_branch
        %132 = sbr.rel (%p129) target = $region12
      $region11: #{tpu_custom_call.1} parent=5 // pred_region
        %s133 = ssub.s32 %s17, 1
      $region12: #{tpu_custom_call.1} parent=5 // pred_fallthru
        _
      %p134 = scmp.lt.s32.totalorder %s17, 2
      // Predicated region
      $region13: #{tpu_custom_call.1} parent=5 // pred_check
        %p135 = pneg %p134
      $region14: #{tpu_custom_call.1} parent=5 // pred_check_branch
        %137 = sbr.rel (%p135) target = $region16
      $region15: #{tpu_custom_call.1} parent=5 // pred_region
        // Predicated region
        $region17: #{tpu_custom_call.1} parent=15 // pred_check
          %p138 = pneg %p55
        $region18: #{tpu_custom_call.1} parent=15 // pred_check_branch
          %140 = sbr.rel (%p138) target = $region20
        $region19: #{tpu_custom_call.1} parent=15 // pred_region
          %s141 = sand.u32 %s45, 1
          %s142 = scalar_lea.sflag [#allocation4], %s141
          %s143 = sand.u32 %s45, 1
          %s144 = smul.addr %s143, 8
          %s145 = scalar_lea.vmem [#allocation3], %s144
          %s146 = sadd.s32 %s24, %s25
          %p147 = scmp.lt.s32.totalorder %s146, 1
          %s148 = scalar_select %p147, %s146, 1
          %s150 = ssub.s32 128, 128
          %151 = vsyncadd %s142, %s150
          %s152 = smul.addr %s148, 128
          %s153 = scalar_lea.hbm %s0, %s152
          %s155 = sshll.u32 %s145, 4
          %s156 = int_to_ptr.vmem [resolvable:$true] %s155
          %158 = dma.hbm_to_vmem [thread:$0]  %s153, 128, %s156, %s142
        $region20: #{tpu_custom_call.1} parent=15 // pred_fallthru
          _
        // Predicated region
        $region21: #{tpu_custom_call.1} parent=15 // pred_check
          %p159 = pneg %p87
        $region22: #{tpu_custom_call.1} parent=15 // pred_check_branch
          %161 = sbr.rel (%p159) target = $region24
        $region23: #{tpu_custom_call.1} parent=15 // pred_region
          %s162 = sand.u32 %s77, 1
          %s163 = scalar_lea.sflag [#allocation7], %s162
          %s164 = sand.u32 %s77, 1
          %s165 = smul.addr %s164, 8
          %s166 = scalar_lea.vmem [#allocation6], %s165
          %s167 = sadd.s32 %s24, %s25
          %p168 = scmp.lt.s32.totalorder %s167, 1
          %s169 = scalar_select %p168, %s167, 1
          %s171 = ssub.s32 128, 128
          %172 = vsyncadd %s163, %s171
          %s173 = smul.addr %s169, 128
          %s174 = scalar_lea.hbm %s1, %s173
          %s176 = sshll.u32 %s166, 4
          %s177 = int_to_ptr.vmem [resolvable:$true] %s176
          %179 = dma.hbm_to_vmem [thread:$0]  %s174, 128, %s177, %s163
        $region24: #{tpu_custom_call.1} parent=15 // pred_fallthru
          _
      $region16: #{tpu_custom_call.1} parent=5 // pred_fallthru
        _
      %p180 = scmp.le.s32.totalorder 1, %s17
      %p181 = scmp.lt.s32.totalorder %s17, 3
      %p182 = pnand %p180, %p181
      %p183 = pneg %p182
      // Predicated region
      $region25: #{tpu_custom_call.1} parent=5 // pred_check
        _
      $region26: #{tpu_custom_call.1} parent=5 // pred_check_branch
        %185 = sbr.rel (%p182) target = $region28
      $region27: #{tpu_custom_call.1} parent=5 // pred_region
        %s186 = ssub.s32 %s17, 1
        %s187 = sand.u32 %s48, 1
        %s188 = scalar_lea.sflag [#allocation4], %s187
        %s189 = sand.u32 %s48, 1
        %s190 = smul.addr %s189, 8
        %s191 = scalar_lea.vmem [#allocation3], %s190
        // Predicated region
        $region29: #{tpu_custom_call.1} parent=27 // pred_check
          %p192 = pneg %p61
        $region30: #{tpu_custom_call.1} parent=27 // pred_check_branch
          %194 = sbr.rel (%p192) target = $region32
        $region31: #{tpu_custom_call.1} parent=27 // pred_region
          %195 = dma.done %s188, 128
        $region32: #{tpu_custom_call.1} parent=27 // pred_fallthru
          _
        %s196 = sand.u32 %s80, 1
        %s197 = scalar_lea.sflag [#allocation7], %s196
        %s198 = sand.u32 %s80, 1
        %s199 = smul.addr %s198, 8
        %s200 = scalar_lea.vmem [#allocation6], %s199
        // Predicated region
        $region33: #{tpu_custom_call.1} parent=27 // pred_check
          %p201 = pneg %p93
        $region34: #{tpu_custom_call.1} parent=27 // pred_check_branch
          %203 = sbr.rel (%p201) target = $region36
        $region35: #{tpu_custom_call.1} parent=27 // pred_region
          %204 = dma.done %s197, 128
        $region36: #{tpu_custom_call.1} parent=27 // pred_fallthru
          _
        %s205 = sand.u32 %s48, 1
        %s206 = scalar_lea.sflag [#allocation4], %s205
        %s207 = sand.u32 %s48, 1
        %s208 = smul.addr %s207, 8
        %s209 = scalar_lea.vmem [#allocation3], %s208
        %p210 = pneg %p61
        %p211 = pneg %p58
        %s212 = sand.u32 %s80, 1
        %s213 = scalar_lea.sflag [#allocation7], %s212
        %s214 = sand.u32 %s80, 1
        %s215 = smul.addr %s214, 8
        %s216 = scalar_lea.vmem [#allocation6], %s215
        %p217 = pneg %p93
        %p218 = pneg %p90
        %p219 = pneg %p119
        %p220 = pneg %p116
        %s221 = sand.u32 %s106, 1
        %s222 = scalar_lea.sflag [#allocation5], %s221
        %s223 = sand.u32 %s106, 1
        %s224 = smul.addr %s223, 8
        %s225 = scalar_lea.vmem [#allocation8], %s224
        %s226 = sadd.s32 %s26, %s27
        %p227 = scmp.lt.s32.totalorder %s226, 1
        %s228 = scalar_select %p227, %s226, 1
        %s229 = sadd.s32 %s26, %s27
        %p230 = scmp.lt.s32.totalorder %s229, 1
        %s231 = scalar_select %p230, %s229, 1
        %p232 = scmp.eq.s32.totalorder %s27, 0
        // Predicated region
        $region37: #{tpu_custom_call.1} parent=27 // pred_check
          %p233 = pneg %p232
        $region38: #{tpu_custom_call.1} parent=27 // pred_check_branch
          %235 = sbr.rel (%p233) target = $region40
        $region39: #{tpu_custom_call.1} parent=27 // pred_region
          %236 = vst [vmem:[#allocation2] sm:$0xff] 0.0
        $region40: #{tpu_custom_call.1} parent=27 // pred_fallthru
          _
        %v237 = vld [vmem:[%s200] sm:$0xff]
        %v238 = vld [vmem:[%s191] sm:$0xff]
        %v239 = vxor.u32 %v238, 2147483648
        %v240 = vmul.f32 %v239, 1.442695
        %v241 = vpow.pop %v240
        %v242 = vadd.f32 %v241, 1.0
        %v243 = vrcp.pop %v242
        %v244 = vmul.f32 1.0, %v243
        %v245 = vsub.f32 %v237, %v244
        %v246 = vand.u32 2147483647, %v245
        %vm247 = vcmp.lt.f32.partialorder %v246, 10.0
        %v248 = vmul.f32 %v246, 0.5
        %v249 = vadd.f32 %v248, 1.0
        %v250 = vlog2.pop %v249
        %v251 = vmul.f32 %v250, 0.6931472
        %v252 = vmul.f32 %v251, 10.0
        %v253 = vsub.f32 %v246, -7.917595
        %v254 = vsel %vm247, %v252, %v253
        %v255 = vld [vmem:[#allocation2] sm:$0xff]
        %v256 = vadd.f32 %v254, 0.0
        %v257 = vadd.f32 %v255, %v256
        %258 = vst [vmem:[#allocation2] sm:$0xff] %v257
        // Predicated region
        $region41: #{tpu_custom_call.1} parent=27 // pred_check
          %p259 = pneg %p232
        $region42: #{tpu_custom_call.1} parent=27 // pred_check_branch
          %261 = sbr.rel (%p259) target = $region44
        $region43: #{tpu_custom_call.1} parent=27 // pred_region
          %v262 = vld [vmem:[#allocation2] sm:$0xff]
          %263 = vst [vmem:[%s225] sm:$0xff] %v262
        $region44: #{tpu_custom_call.1} parent=27 // pred_fallthru
          _
        %s264 = sand.u32 %s106, 1
        %s265 = scalar_lea.sflag [#allocation5], %s264
        %s266 = sand.u32 %s106, 1
        %s267 = smul.addr %s266, 8
        %s268 = scalar_lea.vmem [#allocation8], %s267
        // Predicated region
        $region45: #{tpu_custom_call.1} parent=27 // pred_check
          %p269 = pneg %p116
        $region46: #{tpu_custom_call.1} parent=27 // pred_check_branch
          %271 = sbr.rel (%p269) target = $region48
        $region47: #{tpu_custom_call.1} parent=27 // pred_region
          %s273 = ssub.s32 128, 128
          %274 = vsyncadd %s265, %s273
          %s275 = smul.addr %s26, 128
          %s276 = scalar_lea.hbm %s2, %s275
          %s278 = sshll.u32 %s268, 4
          %s279 = int_to_ptr.vmem [resolvable:$true] %s278
          %281 = dma.vmem_to_hbm [thread:$0]  %s279, 128, %s276, %s265
        $region48: #{tpu_custom_call.1} parent=27 // pred_fallthru
          _
      $region28: #{tpu_custom_call.1} parent=5 // pred_fallthru
        _
      %p282 = scmp.le.s32.totalorder 2, %s17
      // Predicated region
      $region49: #{tpu_custom_call.1} parent=5 // pred_check
        %p283 = pneg %p282
      $region50: #{tpu_custom_call.1} parent=5 // pred_check_branch
        %285 = sbr.rel (%p283) target = $region52
      $region51: #{tpu_custom_call.1} parent=5 // pred_region
        %s286 = ssub.s32 %s17, 2
        // Predicated region
        $region53: #{tpu_custom_call.1} parent=51 // pred_check
          %p287 = pneg %p122
        $region54: #{tpu_custom_call.1} parent=51 // pred_check_branch
          %289 = sbr.rel (%p287) target = $region56
        $region55: #{tpu_custom_call.1} parent=51 // pred_region
          %s290 = sand.u32 %s107, 1
          %s291 = scalar_lea.sflag [#allocation5], %s290
          %s292 = sand.u32 %s107, 1
          %s293 = smul.addr %s292, 8
          %s294 = scalar_lea.vmem [#allocation8], %s293
          %295 = dma.done %s291, 128
        $region56: #{tpu_custom_call.1} parent=51 // pred_fallthru
          _
      $region52: #{tpu_custom_call.1} parent=5 // pred_fallthru
        _
    $region6: #{tpu_custom_call.1} parent=1 // loop_footer
      %s21 = sadd.s32 1, %s17
    $region7: #{tpu_custom_call.1} parent=1 // loop_footer_branch
      %16 = sbr.rel target = $region3
    $region8: #{tpu_custom_call.1} parent=1 // loop_exit
      _
    %296 = vsyncpa [#allocation4], 1
    %s297 = scalar_lea.sflag [#allocation4], 1
    %298 = vsyncpa %s297, 1
    %299 = vsyncpa [#allocation7], 1
    %s300 = scalar_lea.sflag [#allocation7], 1
    %301 = vsyncpa %s300, 1
    %302 = vsyncpa [#allocation5], 1
    %s303 = scalar_lea.sflag [#allocation5], 1
    %304 = vsyncpa %s303, 1

</llo_original>
